<compile_context>
chip_gen: v7x
topology: tpu7x:2x2x1
jax: 0.10.0
libtpu: 0.0.40
codegen_flags: <defaults>
</compile_context>

<pallas_src>
import functools

import jax
import jax.numpy as jnp
from jax.experimental import pallas as pl
from jax.experimental.pallas import tpu as pltpu

_LANE = 128
_SUB = 8
_TILE_ELEMS = _SUB * _LANE            # 1024 elements = one (8,128) f32 vreg
_MAX_BLOCK_ROWS = 8192                # 8192 x 128 x 4B = 4 MiB per f32 input block
_CHUNK_ROWS = 256                     # in-kernel fold granularity (small temps)
_VMEM_LIMIT_BYTES = 32 * 1024 * 1024  # fits v5e/v6e (128 MiB) and v7x (64 MiB)


def _num_tensorcores():
    """Best-effort TensorCore-per-chip count; 0 means 'unknown'."""
    try:
        info = pltpu.get_tpu_info()
    except Exception:
        return 0
    for name in ("tensorcores_per_chip", "num_tensorcores", "cores_per_chip",
                 "tensor_cores_per_chip", "num_cores"):
        n = getattr(info, name, None)
        if n is None:
            continue
        try:
            n = int(n)
        except (TypeError, ValueError):
            continue
        if n > 0:
            return min(n, 2)
    return 0


def _iou_kernel(pr_ref, gt_ref, inter_ref, gtsum_ref, prsum_ref, *,
                threshold, rows, block_rows, chunk_rows,
                tiles_per_split, tiles_total, ragged):
    """Grid = (splits, row_tiles). Output blocks stay resident over the inner
    axis and act as (1, 8, 128) accumulators (one row per split)."""
    i = pl.program_id(1)
    tile = pl.program_id(0) * tiles_per_split + i

    @pl.when(i == 0)
    def _init():
        inter_ref[...] = jnp.zeros_like(inter_ref)
        gtsum_ref[...] = jnp.zeros_like(gtsum_ref)
        prsum_ref[...] = jnp.zeros_like(prsum_ref)

    num_chunks = block_rows // chunk_rows
    groups = chunk_rows // _SUB

    def run(masked):
        # Fold one (chunk_rows, 128) contribution down to (8, 128) with pure
        # VPU adds; the three running sums live in the fori_loop carry (vregs),
        # so there are no big-accumulator loads/stores per input vreg.
        def fold(x):
            return x.reshape(groups, _SUB, _LANE).sum(axis=0)

        def body(j, carry):
            ci, cg, cp = carry
            base = j * chunk_rows
            r0 = pl.multiple_of(base, chunk_rows)
            pr = pr_ref[pl.ds(r0, chunk_rows), :]                  # native dtype
            gt = gt_ref[pl.ds(r0, chunk_rows), :].astype(jnp.float32)
            pred = pr > threshold                                  # strict >, like torch
            if masked:
                # Row-level validity mask (only the ragged boundary tile pays
                # this). Everything is in *row* units, so no int32 overflow.
                local = jax.lax.broadcasted_iota(
                    jnp.int32, (chunk_rows, _LANE), 0)
                valid = (tile * block_rows + base + local) < rows
                pred = jnp.logical_and(pred, valid)
                gt = jnp.where(valid, gt, 0.0)
            return (ci + fold(jnp.where(pred, gt, 0.0)),
                    cg + fold(gt),
                    cp + fold(pred.astype(jnp.float32)))

        zero = jnp.zeros((_SUB, _LANE), jnp.float32)
        ci, cg, cp = jax.lax.fori_loop(0, num_chunks, body, (zero, zero, zero))
        inter_ref[0] += ci
        gtsum_ref[0] += cg
        prsum_ref[0] += cp

    # Skip compute on overhang steps (their clamped DMA re-targets the previous
    # block, so the pipeline does not re-fetch it either).
    @pl.when(tile < tiles_total)
    def _accumulate():
        if ragged:
            @pl.when(tile == tiles_total - 1)
            def _boundary():
                run(True)

            @pl.when(tile != tiles_total - 1)
            def _full():
                run(False)
        else:
            run(False)


def iou_pallas(pr, gt, threshold=0.0, eps=1e-07):
    """Computes IoU(pr, gt) exactly like the PyTorch IoU module's forward."""
    assert pr.shape == gt.shape
    threshold = float(threshold)
    eps = float(eps)

    total = pr.size
    pr_flat = pr.reshape(-1)
    gt_flat = gt.reshape(-1)

    if total < _TILE_ELEMS:
        # Tiny input: pad a single (8,128) tile. pr pads with -inf (strict '>'
        # rejects it for any finite threshold) and gt pads with 0, so the
        # padding contributes nothing -- no in-kernel mask needed.
        pad = _TILE_ELEMS - total
        if jnp.issubdtype(pr_flat.dtype, jnp.floating):
            pad_val = float("-inf")
        else:
            pad_val = int(jnp.iinfo(pr_flat.dtype).min)
        pr_flat = jnp.pad(pr_flat, (0, pad), constant_values=pad_val)
        gt_flat = jnp.pad(gt_flat, (0, pad), constant_values=0)
        main, tail = _TILE_ELEMS, 0
    else:
        # Kernel streams the (8*128)-aligned prefix; the <1024-element tail is
        # a tiny XLA-side reduction (no full-array pad / extra HBM pass).
        tail = total % _TILE_ELEMS
        main = total - tail

    pr_main = pr_flat if tail == 0 else pr_flat[:main]
    gt_main = gt_flat if tail == 0 else gt_flat[:main]

    rows = main // _LANE                       # multiple of 8
    pr2 = pr_main.reshape(rows, _LANE)
    gt2 = gt_main.reshape(rows, _LANE)

    # Big, chunk-aligned blocks; any leftover rows land in one ragged boundary
    # tile which is the only tile that ever computes a mask.
    if rows >= _CHUNK_ROWS:
        block_rows = min(_MAX_BLOCK_ROWS, (rows // _CHUNK_ROWS) * _CHUNK_ROWS)
        chunk_rows = _CHUNK_ROWS
    else:
        block_rows = rows
        chunk_rows = rows
    tiles_total = pl.cdiv(rows, block_rows)
    ragged = (rows % block_rows) != 0

    n_cores = _num_tensorcores()
    if n_cores == 1:
        num_splits = 1                         # single-TC chip: no split overhead
    else:
        num_splits = 2 if tiles_total >= 2 else 1
    tiles_per_split = pl.cdiv(tiles_total, num_splits)

    def in_map(c, i):
        # Clamp overhang steps onto the last real tile (compute is skipped and
        # the repeated block index lets the pipeline skip the re-fetch).
        return (jnp.minimum(c * tiles_per_split + i, tiles_total - 1), 0)

    def out_map(c, i):
        return (c, 0, 0)

    kernel = functools.partial(
        _iou_kernel,
        threshold=threshold,
        rows=rows,
        block_rows=block_rows,
        chunk_rows=chunk_rows,
        tiles_per_split=tiles_per_split,
        tiles_total=tiles_total,
        ragged=ragged,
    )

    part_shape = jax.ShapeDtypeStruct((num_splits, _SUB, _LANE), jnp.float32)
    inter_p, gt_p, pr_p = pl.pallas_call(
        kernel,
        out_shape=(part_shape, part_shape, part_shape),
        grid_spec=pltpu.PrefetchScalarGridSpec(
            num_scalar_prefetch=0,
            grid=(num_splits, tiles_per_split),
            in_specs=[
                pl.BlockSpec((block_rows, _LANE), in_map),
                pl.BlockSpec((block_rows, _LANE), in_map),
            ],
            out_specs=[
                pl.BlockSpec((1, _SUB, _LANE), out_map),
                pl.BlockSpec((1, _SUB, _LANE), out_map),
                pl.BlockSpec((1, _SUB, _LANE), out_map),
            ],
        ),
        compiler_params=pltpu.CompilerParams(
            dimension_semantics=("parallel", "arbitrary"),
            vmem_limit_bytes=_VMEM_LIMIT_BYTES,
        ),
    )(pr2, gt2)

    intersection = jnp.sum(inter_p)
    gt_sum = jnp.sum(gt_p)
    pr_sum = jnp.sum(pr_p)

    if tail:
        # <1024 leftover elements: trivial XLA-side reduction.
        pr_t = pr_flat[main:]
        gt_t = gt_flat[main:].astype(jnp.float32)
        pred_t = pr_t > threshold
        intersection = intersection + jnp.sum(jnp.where(pred_t, gt_t, 0.0))
        gt_sum = gt_sum + jnp.sum(gt_t)
        pr_sum = pr_sum + jnp.sum(pred_t.astype(jnp.float32))

    intersection = intersection + eps
    union = gt_sum + pr_sum - intersection + eps
    return intersection / union


def iou_reference(pr, gt, threshold=0.0, eps=1e-07):
    pr_bin = (pr > threshold).astype(jnp.float32)
    gt = gt.astype(jnp.float32)
    intersection = jnp.sum(gt * pr_bin) + eps
    union = jnp.sum(gt) + jnp.sum(pr_bin) - intersection + eps
    return intersection / union


if __name__ == "__main__":
    key = jax.random.PRNGKey(0)
    k_pr, k_gt = jax.random.split(key)

    # Small shapes consistent with a segmentation head: (N, C, H, W).
    shape = (2, 4, 16, 16)
    pr = jax.random.normal(k_pr, shape, dtype=jnp.float32)               # logits
    gt = (jax.random.uniform(k_gt, shape) > 0.5).astype(jnp.float32)     # binary mask

    result = iou_pallas(pr, gt)
    jax.block_until_ready(result)
    expected = iou_reference(pr, gt)
    assert jnp.allclose(result, expected, rtol=1e-5, atol=1e-6), (result, expected)

    # Exercise the unaligned-tail, ragged-boundary-tile and tiny-input paths.
    for extra_shape in [(3, 5, 7, 11), (1, 3, 300, 301), (2, 4, 8, 8)]:
        kp, kg = jax.random.split(jax.random.PRNGKey(1))
        pr_e = jax.random.normal(kp, extra_shape, dtype=jnp.float32)
        gt_e = (jax.random.uniform(kg, extra_shape) > 0.5).astype(jnp.float32)
        r = iou_pallas(pr_e, gt_e)
        jax.block_until_ready(r)
        e = iou_reference(pr_e, gt_e)
        assert jnp.allclose(r, e, rtol=1e-4, atol=1e-6), (extra_shape, r, e)

    print("KERNEL_OK")
</pallas_src>

<mosaic_0001>
module attributes {stable_mosaic.version = 11 : i64} {
  func.func @_iou_kernel(%arg0: i32, %arg1: i32, %arg2: memref<16x128xf32, #tpu.memory_space<vmem>>, %arg3: memref<16x128xf32, #tpu.memory_space<vmem>>, %arg4: memref<1x8x128xf32, #tpu.memory_space<vmem>>, %arg5: memref<1x8x128xf32, #tpu.memory_space<vmem>>, %arg6: memref<1x8x128xf32, #tpu.memory_space<vmem>>) attributes {dimension_semantics = [#tpu.dimension_semantics<parallel>, #tpu.dimension_semantics<arbitrary>], iteration_bounds = array<i64: 1, 1>, scalar_prefetch = 0 : i64, scratch_operands = 0 : i64, tpu.core_type = #tpu.core_type<tc>, window_params = [{transform_indices = @transform_0, window_bounds = array<i64: 16, 128>}, {transform_indices = @transform_1, window_bounds = array<i64: 16, 128>}, {transform_indices = @transform_2, window_bounds = array<i64: 1, 8, 128>}, {transform_indices = @transform_3, window_bounds = array<i64: 1, 8, 128>}, {transform_indices = @transform_4, window_bounds = array<i64: 1, 8, 128>}]} {
    %c1_i32 = arith.constant 1 : i32
    %0 = arith.muli %arg0, %c1_i32 : i32
    %1 = arith.addi %0, %arg1 : i32
    %c0_i32 = arith.constant 0 : i32
    %2 = arith.cmpi eq, %arg1, %c0_i32 : i32
    %3 = arith.extui %2 : i1 to i32
    %c0_i32_0 = arith.constant 0 : i32
    %4 = arith.cmpi ne, %3, %c0_i32_0 : i32
    scf.if %4 {
      %cst = arith.constant 0.000000e+00 : f32
      %8 = vector.broadcast %cst : f32 to vector<1x8x128xf32>
      %c0 = arith.constant 0 : index
      %c0_3 = arith.constant 0 : index
      %c0_4 = arith.constant 0 : index
      %9 = vector.load %arg4[%c0, %c0_3, %c0_4] : memref<1x8x128xf32, #tpu.memory_space<vmem>>, vector<1x8x128xf32>
      tpu.vector_store %arg4[%c0, %c0_3, %c0_4], %8 {strides = array<i32>} : memref<1x8x128xf32, #tpu.memory_space<vmem>>, vector<1x8x128xf32>,
      %cst_5 = arith.constant 0.000000e+00 : f32
      %10 = vector.broadcast %cst_5 : f32 to vector<1x8x128xf32>
      %c0_6 = arith.constant 0 : index
      %c0_7 = arith.constant 0 : index
      %c0_8 = arith.constant 0 : index
      %11 = vector.load %arg5[%c0_6, %c0_7, %c0_8] : memref<1x8x128xf32, #tpu.memory_space<vmem>>, vector<1x8x128xf32>
      tpu.vector_store %arg5[%c0_6, %c0_7, %c0_8], %10 {strides = array<i32>} : memref<1x8x128xf32, #tpu.memory_space<vmem>>, vector<1x8x128xf32>,
      %cst_9 = arith.constant 0.000000e+00 : f32
      %12 = vector.broadcast %cst_9 : f32 to vector<1x8x128xf32>
      %c0_10 = arith.constant 0 : index
      %c0_11 = arith.constant 0 : index
      %c0_12 = arith.constant 0 : index
      %13 = vector.load %arg6[%c0_10, %c0_11, %c0_12] : memref<1x8x128xf32, #tpu.memory_space<vmem>>, vector<1x8x128xf32>
      tpu.vector_store %arg6[%c0_10, %c0_11, %c0_12], %12 {strides = array<i32>} : memref<1x8x128xf32, #tpu.memory_space<vmem>>, vector<1x8x128xf32>,
    } else {
    }
    %c1_i32_1 = arith.constant 1 : i32
    %5 = arith.cmpi slt, %1, %c1_i32_1 : i32
    %6 = arith.extui %5 : i1 to i32
    %c0_i32_2 = arith.constant 0 : i32
    %7 = arith.cmpi ne, %6, %c0_i32_2 : i32
    scf.if %7 {
      %cst = arith.constant 0.000000e+00 : f32
      %8 = vector.broadcast %cst : f32 to vector<8x128xf32>
      %c0_i32_3 = arith.constant 0 : i32
      %c16_i32 = arith.constant 16 : i32
      %9 = arith.muli %c0_i32_3, %c16_i32 : i32
      %10 = tpu.assume_multiple %9, 16 : i32
      %11 = arith.index_cast %10 : i32 to index
      %c0 = arith.constant 0 : index
      %12 = vector.load %arg2[%11, %c0] : memref<16x128xf32, #tpu.memory_space<vmem>>, vector<16x128xf32>
      %13 = arith.index_cast %10 : i32 to index
      %c0_4 = arith.constant 0 : index
      %14 = vector.load %arg3[%13, %c0_4] : memref<16x128xf32, #tpu.memory_space<vmem>>, vector<16x128xf32>
      %cst_5 = arith.constant 0.000000e+00 : f32
      %15 = vector.broadcast %cst_5 : f32 to vector<16x128xf32>
      %16 = arith.cmpf ogt, %12, %15 : vector<16x128xf32>
      %cst_6 = arith.constant 0.000000e+00 : f32
      %17 = vector.broadcast %cst_6 : f32 to vector<16x128xf32>
      %18 = arith.select %16, %14, %17 : vector<16x128xi1>, vector<16x128xf32>
      %19 = vector.shape_cast %18 : vector<16x128xf32> to vector<2x8x128xf32>
      %cst_7 = arith.constant dense<0.000000e+00> : vector<8x128xf32>
      %20 = vector.multi_reduction <add>, %19, %cst_7 [0] : vector<2x8x128xf32> to vector<8x128xf32>
      %21 = arith.addf %8, %20 : vector<8x128xf32>
      %22 = vector.shape_cast %14 : vector<16x128xf32> to vector<2x8x128xf32>
      %cst_8 = arith.constant dense<0.000000e+00> : vector<8x128xf32>
      %23 = vector.multi_reduction <add>, %22, %cst_8 [0] : vector<2x8x128xf32> to vector<8x128xf32>
      %24 = arith.addf %8, %23 : vector<8x128xf32>
      %25 = arith.extui %16 : vector<16x128xi1> to vector<16x128xi32>
      %26 = arith.sitofp %25 : vector<16x128xi32> to vector<16x128xf32>
      %27 = vector.shape_cast %26 : vector<16x128xf32> to vector<2x8x128xf32>
      %cst_9 = arith.constant dense<0.000000e+00> : vector<8x128xf32>
      %28 = vector.multi_reduction <add>, %27, %cst_9 [0] : vector<2x8x128xf32> to vector<8x128xf32>
      %29 = arith.addf %8, %28 : vector<8x128xf32>
      %c1_i32_10 = arith.constant 1 : i32
      %c0_11 = arith.constant 0 : index
      %c0_12 = arith.constant 0 : index
      %c0_13 = arith.constant 0 : index
      %30 = vector.load %arg4[%c0_11, %c0_12, %c0_13] : memref<1x8x128xf32, #tpu.memory_space<vmem>>, vector<1x8x128xf32>
      %31 = vector.shape_cast %30 : vector<1x8x128xf32> to vector<8x128xf32>
      %32 = arith.addf %31, %21 : vector<8x128xf32>
      %c0_14 = arith.constant 0 : index
      %c0_15 = arith.constant 0 : index
      %c0_16 = arith.constant 0 : index
      %33 = vector.load %arg4[%c0_14, %c0_15, %c0_16] : memref<1x8x128xf32, #tpu.memory_space<vmem>>, vector<1x8x128xf32>
      %34 = vector.shape_cast %33 : vector<1x8x128xf32> to vector<8x128xf32>
      %35 = vector.shape_cast %32 : vector<8x128xf32> to vector<1x8x128xf32>
      tpu.vector_store %arg4[%c0_14, %c0_15, %c0_16], %35 {strides = array<i32>} : memref<1x8x128xf32, #tpu.memory_space<vmem>>, vector<1x8x128xf32>,
      %c0_17 = arith.constant 0 : index
      %c0_18 = arith.constant 0 : index
      %c0_19 = arith.constant 0 : index
      %36 = vector.load %arg5[%c0_17, %c0_18, %c0_19] : memref<1x8x128xf32, #tpu.memory_space<vmem>>, vector<1x8x128xf32>
      %37 = vector.shape_cast %36 : vector<1x8x128xf32> to vector<8x128xf32>
      %38 = arith.addf %37, %24 : vector<8x128xf32>
      %c0_20 = arith.constant 0 : index
      %c0_21 = arith.constant 0 : index
      %c0_22 = arith.constant 0 : index
      %39 = vector.load %arg5[%c0_20, %c0_21, %c0_22] : memref<1x8x128xf32, #tpu.memory_space<vmem>>, vector<1x8x128xf32>
      %40 = vector.shape_cast %39 : vector<1x8x128xf32> to vector<8x128xf32>
      %41 = vector.shape_cast %38 : vector<8x128xf32> to vector<1x8x128xf32>
      tpu.vector_store %arg5[%c0_20, %c0_21, %c0_22], %41 {strides = array<i32>} : memref<1x8x128xf32, #tpu.memory_space<vmem>>, vector<1x8x128xf32>,
      %c0_23 = arith.constant 0 : index
      %c0_24 = arith.constant 0 : index
      %c0_25 = arith.constant 0 : index
      %42 = vector.load %arg6[%c0_23, %c0_24, %c0_25] : memref<1x8x128xf32, #tpu.memory_space<vmem>>, vector<1x8x128xf32>
      %43 = vector.shape_cast %42 : vector<1x8x128xf32> to vector<8x128xf32>
      %44 = arith.addf %43, %29 : vector<8x128xf32>
      %c0_26 = arith.constant 0 : index
      %c0_27 = arith.constant 0 : index
      %c0_28 = arith.constant 0 : index
      %45 = vector.load %arg6[%c0_26, %c0_27, %c0_28] : memref<1x8x128xf32, #tpu.memory_space<vmem>>, vector<1x8x128xf32>
      %46 = vector.shape_cast %45 : vector<1x8x128xf32> to vector<8x128xf32>
      %47 = vector.shape_cast %44 : vector<8x128xf32> to vector<1x8x128xf32>
      tpu.vector_store %arg6[%c0_26, %c0_27, %c0_28], %47 {strides = array<i32>} : memref<1x8x128xf32, #tpu.memory_space<vmem>>, vector<1x8x128xf32>,
    } else {
    }
    return
  }
  func.func @transform_0(%arg0: i32, %arg1: i32) -> (i32, i32) {
    %c1_i32 = arith.constant 1 : i32
    %0 = arith.muli %arg0, %c1_i32 : i32
    %1 = arith.addi %0, %arg1 : i32
    %c0_i32 = arith.constant 0 : i32
    %2 = arith.minsi %1, %c0_i32 : i32
    %c0_i32_0 = arith.constant 0 : i32
    %c0_i32_1 = arith.constant 0 : i32
    return %2, %c0_i32_0 : i32, i32
  }
  func.func @transform_1(%arg0: i32, %arg1: i32) -> (i32, i32) {
    %c1_i32 = arith.constant 1 : i32
    %0 = arith.muli %arg0, %c1_i32 : i32
    %1 = arith.addi %0, %arg1 : i32
    %c0_i32 = arith.constant 0 : i32
    %2 = arith.minsi %1, %c0_i32 : i32
    %c0_i32_0 = arith.constant 0 : i32
    %c0_i32_1 = arith.constant 0 : i32
    return %2, %c0_i32_0 : i32, i32
  }
  func.func @transform_2(%arg0: i32, %arg1: i32) -> (i32, i32, i32) {
    %c0_i32 = arith.constant 0 : i32
    %c0_i32_0 = arith.constant 0 : i32
    %c0_i32_1 = arith.constant 0 : i32
    return %arg0, %c0_i32, %c0_i32_0 : i32, i32, i32
  }
  func.func @transform_3(%arg0: i32, %arg1: i32) -> (i32, i32, i32) {
    %c0_i32 = arith.constant 0 : i32
    %c0_i32_0 = arith.constant 0 : i32
    %c0_i32_1 = arith.constant 0 : i32
    return %arg0, %c0_i32, %c0_i32_0 : i32, i32, i32
  }
  func.func @transform_4(%arg0: i32, %arg1: i32) -> (i32, i32, i32) {
    %c0_i32 = arith.constant 0 : i32
    %c0_i32_0 = arith.constant 0 : i32
    %c0_i32_1 = arith.constant 0 : i32
    return %arg0, %c0_i32, %c0_i32_0 : i32, i32, i32
  }
}

</mosaic_0001>

<llo_original>
// kernel: tpu_custom_call.1
$region0: #{tpu_custom_call.1}
  #allocation0 [shape = 'u32[]', space=smem, size = 0x4, offset = 0x4, fixed_abs, tag = 'smem constant byte address 0x4 - core index']
  #allocation1 [shape = 'u32[144,128]{1,0:T(1,128)}', space=vmem, size = 0x12000, scoped, tag = 'internal scratch']
  %s0 = inlined_call_operand.hbm [shape: f32[16,128], index: 0, kind: input, shape index: {}]
  %s1 = inlined_call_operand.hbm [shape: f32[16,128], index: 1, kind: input, shape index: {}]
  %s2 = inlined_call_operand.hbm [shape: f32[1,8,128], index: 2, kind: output, shape index: {0}]
  %s3 = inlined_call_operand.hbm [shape: f32[1,8,128], index: 3, kind: output, shape index: {1}]
  %s4 = inlined_call_operand.hbm [shape: f32[1,8,128], index: 4, kind: output, shape index: {2}]
  %5 = xla_tuple %s2, %s3, %s4
  %s6 = sld [smem:[#allocation0]]
  $region50: #{tpu_custom_call.1} parent=0
    _
  %s8 = ssub.s32 1, %s6
  %s9 = scalar_select 0, %s8, %s6
  $region1: #{tpu_custom_call.1} parent=0
    #allocation2 [shape = 'u8[8192]{0}', space=vmem, size = 0x2000, scoped, tag = 'input window, operand 0, single buffered']
    #allocation3 [shape = 's32[1]{0}', space=sflag, size = 0x4, scoped, tag = 'scoped memory for tpu_custom_call.1']
    #allocation4 [shape = 's32[1]{0}', space=sflag, size = 0x4, scoped, tag = 'scoped memory for tpu_custom_call.1']
    #allocation5 [shape = 'u8[8192]{0}', space=vmem, size = 0x2000, scoped, tag = 'input window, operand 1, single buffered']
    #allocation6 [shape = 's32[1]{0}', space=sflag, size = 0x4, scoped, tag = 'scoped memory for tpu_custom_call.1']
    #allocation7 [shape = 'u8[4096]{0}', space=vmem, size = 0x1000, scoped, tag = 'output window, operand 0, single buffered']
    #allocation8 [shape = 'u8[4096]{0}', space=vmem, size = 0x1000, scoped, tag = 'output window, operand 1, single buffered']
    #allocation9 [shape = 's32[1]{0}', space=sflag, size = 0x4, scoped, tag = 'scoped memory for tpu_custom_call.1']
    #allocation10 [shape = 'u8[4096]{0}', space=vmem, size = 0x1000, scoped, tag = 'output window, operand 2, single buffered']
    %10 = vsyncpa [#allocation3], 0
    %11 = vsyncpa [#allocation6], 0
    %12 = vsyncpa [#allocation4], 0
    %13 = vsyncpa [#allocation9], 0
    // Predicated region
    $region2: #{tpu_custom_call.1} parent=1 // pred_check
      _
    $region3: #{tpu_custom_call.1} parent=1 // pred_check_branch
      %15 = sbr.rel (0) target = $region5
    $region4: #{tpu_custom_call.1} parent=1 // pred_region
      %s16 = sadd.s32 0, 0
      %p17 = scmp.lt.s32.totalorder %s16, 0
      %s18 = scalar_select %p17, %s16, 0
      %s19 = smul.u32 2, %s18
      %s21 = ssub.s32 256, 256
      %22 = vsyncadd [#allocation3], %s21
      %s23 = smul.addr %s19, 128
      %s24 = scalar_lea.hbm %s0, %s23
      %s25 = sshll.u32 [#allocation2], 4
      %s26 = int_to_ptr.vmem [resolvable:$true] %s25
      %31 = dma.hbm_to_vmem [thread:$0]  %s24, 256, %s26, [#allocation3], 128, 128, 8
    $region5: #{tpu_custom_call.1} parent=1 // pred_fallthru
      _
    // Predicated region
    $region6: #{tpu_custom_call.1} parent=1 // pred_check
      _
    $region7: #{tpu_custom_call.1} parent=1 // pred_check_branch
      %33 = sbr.rel (0) target = $region9
    $region8: #{tpu_custom_call.1} parent=1 // pred_region
      %s34 = sadd.s32 0, 0
      %p35 = scmp.lt.s32.totalorder %s34, 0
      %s36 = scalar_select %p35, %s34, 0
      %s37 = smul.u32 2, %s36
      %s39 = ssub.s32 256, 256
      %40 = vsyncadd [#allocation6], %s39
      %s41 = smul.addr %s37, 128
      %s42 = scalar_lea.hbm %s1, %s41
      %s43 = sshll.u32 [#allocation5], 4
      %s44 = int_to_ptr.vmem [resolvable:$true] %s43
      %49 = dma.hbm_to_vmem [thread:$0]  %s42, 256, %s44, [#allocation6], 128, 128, 8
    $region9: #{tpu_custom_call.1} parent=1 // pred_fallthru
      _
    // Predicated region
    $region10: #{tpu_custom_call.1} parent=1 // pred_check
      _
    $region11: #{tpu_custom_call.1} parent=1 // pred_check_branch
      %51 = sbr.rel (0) target = $region13
    $region12: #{tpu_custom_call.1} parent=1 // pred_region
      %52 = dma.done [#allocation3], 256
    $region13: #{tpu_custom_call.1} parent=1 // pred_fallthru
      _
    // Predicated region
    $region14: #{tpu_custom_call.1} parent=1 // pred_check
      _
    $region15: #{tpu_custom_call.1} parent=1 // pred_check_branch
      %54 = sbr.rel (0) target = $region17
    $region16: #{tpu_custom_call.1} parent=1 // pred_region
      %55 = dma.done [#allocation6], 256
    $region17: #{tpu_custom_call.1} parent=1 // pred_fallthru
      _
    %s56 = sadd.s32 0, 0
    %p57 = scmp.lt.s32.totalorder %s56, 0
    %s58 = scalar_select %p57, %s56, 0
    %s59 = smul.u32 2, %s58
    %s60 = sadd.s32 0, 0
    %p61 = scmp.lt.s32.totalorder %s60, 0
    %s62 = scalar_select %p61, %s60, 0
    %s63 = smul.u32 2, %s62
    %s64 = sadd.s32 0, 0
    %p65 = scmp.eq.s32.totalorder 0, 0
    // Predicated region
    $region18: #{tpu_custom_call.1} parent=1 // pred_check
      %p66 = pneg %p65
    $region19: #{tpu_custom_call.1} parent=1 // pred_check_branch
      %68 = sbr.rel (%p66) target = $region21
    $region20: #{tpu_custom_call.1} parent=1 // pred_region
      %69 = vst [vmem:[#allocation7] sm:$0xff] 0.0
      %70 = vst [vmem:[#allocation8] sm:$0xff] 0.0
      %71 = vst [vmem:[#allocation10] sm:$0xff] 0.0
    $region21: #{tpu_custom_call.1} parent=1 // pred_fallthru
      _
    %p72 = scmp.lt.s32.totalorder %s64, 1
    // Predicated region
    $region22: #{tpu_custom_call.1} parent=1 // pred_check
      %p73 = pneg %p72
    $region23: #{tpu_custom_call.1} parent=1 // pred_check_branch
      %75 = sbr.rel (%p73) target = $region25
    $region24: #{tpu_custom_call.1} parent=1 // pred_region
      %v76 = vld [vmem:[#allocation2] sm:$0xff]
      %v77 = vld [vmem:[#allocation2 + $0x8] sm:$0xff]
      %v78 = vld [vmem:[#allocation5] sm:$0xff]
      %v79 = vld [vmem:[#allocation5 + $0x8] sm:$0xff]
      %vm80 = vcmp.gt.f32.partialorder %v76, 0.0
      %vm81 = vcmp.gt.f32.partialorder %v77, 0.0
      %v82 = vsel %vm80, %v78, 0.0
      %v83 = vsel %vm81, %v79, 0.0
      %v84 = vadd.f32 %v82, %v83
      %v85 = vadd.f32 %v84, 0.0
      %v86 = vadd.f32 %v78, %v79
      %v87 = vadd.f32 %v86, 0.0
      %v88 = vsel %vm80, 1, 0
      %v89 = vsel %vm81, 1, 0
      %v90 = vcvt.s32.f32 %v88
      %v91 = vcvt.s32.f32 %v89
      %v92 = vadd.f32 %v90, %v91
      %v93 = vadd.f32 %v92, 0.0
      %v94 = vld [vmem:[#allocation7] sm:$0xff]
      %v95 = vadd.f32 %v94, %v85
      %96 = vst [vmem:[#allocation7] sm:$0xff] %v95
      %v97 = vld [vmem:[#allocation8] sm:$0xff]
      %v98 = vadd.f32 %v97, %v87
      %99 = vst [vmem:[#allocation8] sm:$0xff] %v98
      %v100 = vld [vmem:[#allocation10] sm:$0xff]
      %v101 = vadd.f32 %v100, %v93
      %102 = vst [vmem:[#allocation10] sm:$0xff] %v101
    $region25: #{tpu_custom_call.1} parent=1 // pred_fallthru
      _
    // Predicated region
    $region26: #{tpu_custom_call.1} parent=1 // pred_check
      _
    $region27: #{tpu_custom_call.1} parent=1 // pred_check_branch
      %104 = sbr.rel (0) target = $region29
    $region28: #{tpu_custom_call.1} parent=1 // pred_region
      %s106 = ssub.s32 128, 128
      %107 = vsyncadd [#allocation4], %s106
      %s109 = sshll.u32 [#allocation7], 4
      %s110 = int_to_ptr.vmem [resolvable:$true] %s109
      %112 = dma.vmem_to_hbm [thread:$0]  %s110, 128, %s2, [#allocation4]
    $region29: #{tpu_custom_call.1} parent=1 // pred_fallthru
      _
    // Predicated region
    $region30: #{tpu_custom_call.1} parent=1 // pred_check
      _
    $region31: #{tpu_custom_call.1} parent=1 // pred_check_branch
      %114 = sbr.rel (0) target = $region33
    $region32: #{tpu_custom_call.1} parent=1 // pred_region
      %s116 = ssub.s32 128, 128
      %117 = vsyncadd [#allocation9], %s116
      %s119 = sshll.u32 [#allocation8], 4
      %s120 = int_to_ptr.vmem [resolvable:$true] %s119
      %122 = dma.vmem_to_hbm [thread:$0]  %s120, 128, %s3, [#allocation9]
    $region33: #{tpu_custom_call.1} parent=1 // pred_fallthru
      _
    // Predicated region
    $region34: #{tpu_custom_call.1} parent=1 // pred_check
      _
    $region35: #{tpu_custom_call.1} parent=1 // pred_check_branch
      %124 = sbr.rel (0) target = $region37
    $region36: #{tpu_custom_call.1} parent=1 // pred_region
      %s126 = ssub.s32 128, 128
      %127 = vsyncadd [#allocation9], %s126
      %s129 = sshll.u32 [#allocation10], 4
      %s130 = int_to_ptr.vmem [resolvable:$true] %s129
      %132 = dma.vmem_to_hbm [thread:$0]  %s130, 128, %s4, [#allocation9]
    $region37: #{tpu_custom_call.1} parent=1 // pred_fallthru
      _
    // Predicated region
    $region38: #{tpu_custom_call.1} parent=1 // pred_check
      _
    $region39: #{tpu_custom_call.1} parent=1 // pred_check_branch
      %134 = sbr.rel (0) target = $region41
    $region40: #{tpu_custom_call.1} parent=1 // pred_region
      %135 = dma.done [#allocation4], 128
    $region41: #{tpu_custom_call.1} parent=1 // pred_fallthru
      _
    // Predicated region
    $region42: #{tpu_custom_call.1} parent=1 // pred_check
      _
    $region43: #{tpu_custom_call.1} parent=1 // pred_check_branch
      %137 = sbr.rel (0) target = $region45
    $region44: #{tpu_custom_call.1} parent=1 // pred_region
      %138 = dma.done [#allocation9], 128
    $region45: #{tpu_custom_call.1} parent=1 // pred_fallthru
      _
    // Predicated region
    $region46: #{tpu_custom_call.1} parent=1 // pred_check
      _
    $region47: #{tpu_custom_call.1} parent=1 // pred_check_branch
      %140 = sbr.rel (0) target = $region49
    $region48: #{tpu_custom_call.1} parent=1 // pred_region
      %141 = dma.done [#allocation9], 128
    $region49: #{tpu_custom_call.1} parent=1 // pred_fallthru
      _
    %142 = vsyncpa [#allocation3], 1
    %143 = vsyncpa [#allocation6], 1
    %144 = vsyncpa [#allocation4], 1
    %145 = vsyncpa [#allocation9], 1

</llo_original>
